<compile_context>
chip_gen: v6e
topology: v6e:2x2x1
jax: 0.10.0
libtpu: 0.0.40
codegen_flags: <defaults>
</compile_context>

<pallas_src>
import jax
import jax.numpy as jnp
from jax.experimental import pallas as pl
from jax.experimental.pallas import tpu as pltpu


# ----------------------------------------------------------------------------
# Pallas kernel: full LSTM recurrence in one invocation.
#   xw_ref : (T, B, 4H)  precomputed x_t @ W_ih^T + (b_ih + b_hh)
#   whh_ref: (H, 4H)     recurrent weight (resident in VMEM)
#   hs_ref : (T, B, H)   per-step hidden states (output)
# NOTE: the recurrence is carried through lax.fori_loop; do NOT give this
# kernel a time grid axis (and never a "parallel" one) -- it is sequential.
# ----------------------------------------------------------------------------
def _lstm_recurrence_kernel(xw_ref, whh_ref, hs_ref):
    T, B, _ = xw_ref.shape
    H = whh_ref.shape[0]

    def step(t, carry):
        h_prev, c_prev = carry
        # gates = (x_t @ W_ih^T + bias) + h_prev @ W_hh^T     -> (B, 4H)
        gates = xw_ref[t] + jnp.dot(
            h_prev, whh_ref[...], preferred_element_type=jnp.float32)

        i_gate = jax.nn.sigmoid(gates[:, 0 * H:1 * H])
        f_gate = jax.nn.sigmoid(gates[:, 1 * H:2 * H])
        g_gate = jnp.tanh(gates[:, 2 * H:3 * H])
        o_gate = jax.nn.sigmoid(gates[:, 3 * H:4 * H])

        c_new = f_gate * c_prev + i_gate * g_gate
        h_new = o_gate * jnp.tanh(c_new)

        hs_ref[t] = h_new                      # dynamic store along time axis
        return (h_new, c_new)

    h0 = jnp.zeros((B, H), jnp.float32)
    c0 = jnp.zeros((B, H), jnp.float32)
    # Short, static trip-count -> unroll for LLO scheduler visibility.
    jax.lax.fori_loop(0, T, step, (h0, c0), unroll=(T <= 32))


# ----------------------------------------------------------------------------
# Wrapper: embedding gather, concat, batch padding, hoisted projections.
# ----------------------------------------------------------------------------
@jax.jit
def decoder_rnn_forward(features, captions, params):
    # word_embedding = embed(captions[:, :-1])  (data-dependent gather -> XLA glue)
    word_emb = jnp.take(params["embed"], captions[:, :-1], axis=0)   # (B, T-1, E)

    # inputs = cat(features.unsqueeze(1), word_embedding, dim=1)     # (B, T, E)
    inputs = jnp.concatenate([features[:, None, :], word_emb], axis=1)
    B, T, E = inputs.shape
    H = params["w_hh_t"].shape[0]

    # Time-major + pad batch up to a sublane multiple of 8.
    x = jnp.transpose(inputs, (1, 0, 2))                             # (T, B, E)
    B_pad = ((B + 7) // 8) * 8
    if B_pad != B:
        x = jnp.pad(x, ((0, 0), (0, B_pad - B), (0, 0)))

    # Hoisted input projection + folded bias: ONE big matmul outside the
    # sequential dependency chain (instead of T tiny matmuls per step).
    bias = params["b_ih"] + params["b_hh"]                           # (4H,)
    xw = jnp.einsum("tbe,ef->tbf", x, params["w_ih_t"],
                    preferred_element_type=jnp.float32) + bias       # (T,Bp,4H)

    hs = pl.pallas_call(
        _lstm_recurrence_kernel,
        out_shape=jax.ShapeDtypeStruct((T, B_pad, H), jnp.float32),
        grid=(1,),
        in_specs=[
            pl.BlockSpec((T, B_pad, 4 * H), lambda i: (0, 0, 0)),    # gate inputs
            pl.BlockSpec((H, 4 * H), lambda i: (0, 0)),              # W_hh^T resident
        ],
        out_specs=pl.BlockSpec((T, B_pad, H), lambda i: (0, 0, 0)),  # hidden states
        compiler_params=pltpu.CompilerParams(
            dimension_semantics=("arbitrary",)),
    )(xw, params["w_hh_t"])

    # FC projection hoisted out of the recurrence: one batched MXU-shaped
    # matmul; 'btv' output kills the final transpose (PyTorch batch_first).
    logits = jnp.einsum("tbh,hv->btv", hs[:, :B, :], params["w_fc_t"],
                        preferred_element_type=jnp.float32) + params["b_fc"]
    return logits                                                    # (B, T, V)


# ----------------------------------------------------------------------------
# Deterministic parameter initialization mirroring DecoderRNN.__init__.
# ----------------------------------------------------------------------------
def init_params(key, embed_size, hidden_size, vocab_size):
    k = jax.random.split(key, 6)
    scale = 1.0 / jnp.sqrt(hidden_size)

    # nn.Embedding default: N(0, 1)
    embed = jax.random.normal(k[0], (vocab_size, embed_size), jnp.float32)

    # nn.LSTM default: U(-1/sqrt(H), 1/sqrt(H)); stored transposed for x @ W^T
    w_ih = jax.random.uniform(k[1], (4 * hidden_size, embed_size), jnp.float32,
                              -scale, scale)
    w_hh = jax.random.uniform(k[2], (4 * hidden_size, hidden_size), jnp.float32,
                              -scale, scale)
    b_ih = jax.random.uniform(k[3], (4 * hidden_size,), jnp.float32, -scale, scale)
    b_hh = jax.random.uniform(k[4], (4 * hidden_size,), jnp.float32, -scale, scale)
    # init_weights(): forget-gate bias slice [H:2H] filled with 1.0 (both biases)
    b_ih = b_ih.at[hidden_size:2 * hidden_size].set(1.0)
    b_hh = b_hh.at[hidden_size:2 * hidden_size].set(1.0)

    # fc: xavier_normal_ weight, bias filled with 0.01
    xavier_std = jnp.sqrt(2.0 / (hidden_size + vocab_size))
    w_fc = jax.random.normal(k[5], (vocab_size, hidden_size), jnp.float32) * xavier_std
    b_fc = jnp.full((vocab_size,), 0.01, jnp.float32)

    return {
        "embed": embed,
        "w_ih_t": w_ih.T,      # (E, 4H)
        "w_hh_t": w_hh.T,      # (H, 4H)
        "b_ih": b_ih,
        "b_hh": b_hh,
        "w_fc_t": w_fc.T,      # (H, V)
        "b_fc": b_fc,
    }


# ----------------------------------------------------------------------------
# Pure-JAX reference (correctness check).
# ----------------------------------------------------------------------------
def reference_forward(features, captions, params):
    word_emb = jnp.take(params["embed"], captions[:, :-1], axis=0)
    inputs = jnp.concatenate([features[:, None, :], word_emb], axis=1)  # (B,T,E)
    B = inputs.shape[0]
    H = params["w_hh_t"].shape[0]
    bias = params["b_ih"] + params["b_hh"]

    def step(carry, x_t):
        h, c = carry
        gates = x_t @ params["w_ih_t"] + h @ params["w_hh_t"] + bias
        i = jax.nn.sigmoid(gates[:, :H])
        f = jax.nn.sigmoid(gates[:, H:2 * H])
        g = jnp.tanh(gates[:, 2 * H:3 * H])
        o = jax.nn.sigmoid(gates[:, 3 * H:])
        c = f * c + i * g
        h = o * jnp.tanh(c)
        return (h, c), h

    h0 = jnp.zeros((B, H), jnp.float32)
    (_, _), hs = jax.lax.scan(step, (h0, h0), jnp.transpose(inputs, (1, 0, 2)))
    hs = jnp.transpose(hs, (1, 0, 2))                                   # (B,T,H)
    return hs @ params["w_fc_t"] + params["b_fc"]


if __name__ == "__main__":
    # Small shapes consistent with the module's forward pass.
    batch = 2
    embed_size = 32
    hidden_size = 32
    vocab_size = 128
    cap_len = 8          # captions length; seq fed to LSTM = 1 (feature) + 7

    key = jax.random.PRNGKey(0)
    k_param, k_feat, k_cap = jax.random.split(key, 3)

    params = init_params(k_param, embed_size, hidden_size, vocab_size)
    features = jax.random.normal(k_feat, (batch, embed_size), jnp.float32)
    captions = jax.random.randint(k_cap, (batch, cap_len), 0, vocab_size, jnp.int32)

    out = decoder_rnn_forward(features, captions, params)
    out = jax.block_until_ready(out)

    ref = reference_forward(features, captions, params)
    assert out.shape == (batch, cap_len, vocab_size), out.shape
    assert jnp.allclose(out, ref, atol=1e-4, rtol=1e-4), "mismatch vs reference"

    # TODO(synk): sample() (greedy autoregressive decode) is not part of forward()
    # and is not implemented here.
    print("KERNEL_OK")
</pallas_src>

<mosaic_0001>
module attributes {stable_mosaic.version = 11 : i64} {
  func.func @_lstm_recurrence_kernel(%arg0: i32, %arg1: memref<8x8x128xf32, #tpu.memory_space<vmem>>, %arg2: memref<32x128xf32, #tpu.memory_space<vmem>>, %arg3: memref<8x8x32xf32, #tpu.memory_space<vmem>>) attributes {dimension_semantics = [#tpu.dimension_semantics<arbitrary>], iteration_bounds = array<i64: 1>, scalar_prefetch = 0 : i64, scratch_operands = 0 : i64, tpu.core_type = #tpu.core_type<tc>, window_params = [{pipeline_mode = #tpu.pipeline_mode<synchronous>, transform_indices = @transform_0, window_bounds = array<i64: 8, 8, 128>}, {pipeline_mode = #tpu.pipeline_mode<synchronous>, transform_indices = @transform_1, window_bounds = array<i64: 32, 128>}, {pipeline_mode = #tpu.pipeline_mode<synchronous>, transform_indices = @transform_2, window_bounds = array<i64: 8, 8, 32>}]} {
    %cst = arith.constant 0.000000e+00 : f32
    %0 = vector.broadcast %cst : f32 to vector<8x32xf32>
    %cst_0 = arith.constant 0.000000e+00 : f32
    %1 = vector.broadcast %cst_0 : f32 to vector<8x32xf32>
    %c0_i32 = arith.constant 0 : i32
    %2 = arith.index_cast %c0_i32 : i32 to index
    %c0 = arith.constant 0 : index
    %c0_1 = arith.constant 0 : index
    %3 = vector.load %arg1[%2, %c0, %c0_1] : memref<8x8x128xf32, #tpu.memory_space<vmem>>, vector<1x8x128xf32>
    %4 = vector.shape_cast %3 : vector<1x8x128xf32> to vector<8x128xf32>
    %c0_2 = arith.constant 0 : index
    %c0_3 = arith.constant 0 : index
    %5 = vector.load %arg2[%c0_2, %c0_3] : memref<32x128xf32, #tpu.memory_space<vmem>>, vector<32x128xf32>
    %cst_4 = arith.constant dense<0.000000e+00> : vector<8x128xf32>
    %6 = tpu.matmul %0, %5, %cst_4 {dimension_numbers = #tpu.dot_dimension_numbers<[1], [0], [0], [1], [0, 0, 1, 1], [], []>} : vector<8x32xf32>, vector<32x128xf32>, vector<8x128xf32> -> vector<8x128xf32>
    %7 = arith.addf %4, %6 : vector<8x128xf32>
    %8 = vector.extract_strided_slice %7 {offsets = [0, 0], sizes = [8, 32], strides = [1, 1]} : vector<8x128xf32> to vector<8x32xf32>
    %9 = arith.negf %8 : vector<8x32xf32>
    %10 = math.exp %9 : vector<8x32xf32>
    %cst_5 = arith.constant 1.000000e+00 : f32
    %11 = vector.broadcast %cst_5 : f32 to vector<8x32xf32>
    %12 = arith.addf %11, %10 : vector<8x32xf32>
    %13 = arith.divf %11, %12 : vector<8x32xf32>
    %14 = vector.extract_strided_slice %7 {offsets = [0, 32], sizes = [8, 32], strides = [1, 1]} : vector<8x128xf32> to vector<8x32xf32>
    %15 = arith.negf %14 : vector<8x32xf32>
    %16 = math.exp %15 : vector<8x32xf32>
    %cst_6 = arith.constant 1.000000e+00 : f32
    %17 = vector.broadcast %cst_6 : f32 to vector<8x32xf32>
    %18 = arith.addf %17, %16 : vector<8x32xf32>
    %19 = arith.divf %17, %18 : vector<8x32xf32>
    %20 = vector.extract_strided_slice %7 {offsets = [0, 64], sizes = [8, 32], strides = [1, 1]} : vector<8x128xf32> to vector<8x32xf32>
    %21 = math.tanh %20 : vector<8x32xf32>
    %22 = vector.extract_strided_slice %7 {offsets = [0, 96], sizes = [8, 32], strides = [1, 1]} : vector<8x128xf32> to vector<8x32xf32>
    %23 = arith.negf %22 : vector<8x32xf32>
    %24 = math.exp %23 : vector<8x32xf32>
    %cst_7 = arith.constant 1.000000e+00 : f32
    %25 = vector.broadcast %cst_7 : f32 to vector<8x32xf32>
    %26 = arith.addf %25, %24 : vector<8x32xf32>
    %27 = arith.divf %25, %26 : vector<8x32xf32>
    %28 = arith.mulf %19, %1 : vector<8x32xf32>
    %29 = arith.mulf %13, %21 : vector<8x32xf32>
    %30 = arith.addf %28, %29 : vector<8x32xf32>
    %31 = math.tanh %30 : vector<8x32xf32>
    %32 = arith.mulf %27, %31 : vector<8x32xf32>
    %33 = arith.index_cast %c0_i32 : i32 to index
    %c0_8 = arith.constant 0 : index
    %c0_9 = arith.constant 0 : index
    %34 = vector.load %arg3[%33, %c0_8, %c0_9] : memref<8x8x32xf32, #tpu.memory_space<vmem>>, vector<1x8x32xf32>
    %35 = vector.shape_cast %34 : vector<1x8x32xf32> to vector<8x32xf32>
    %36 = vector.shape_cast %32 : vector<8x32xf32> to vector<1x8x32xf32>
    tpu.vector_store %arg3[%33, %c0_8, %c0_9], %36 {strides = array<i32>} : memref<8x8x32xf32, #tpu.memory_space<vmem>>, vector<1x8x32xf32>,
    %c1_i32 = arith.constant 1 : i32
    %37 = arith.index_cast %c1_i32 : i32 to index
    %c0_10 = arith.constant 0 : index
    %c0_11 = arith.constant 0 : index
    %38 = vector.load %arg1[%37, %c0_10, %c0_11] : memref<8x8x128xf32, #tpu.memory_space<vmem>>, vector<1x8x128xf32>
    %39 = vector.shape_cast %38 : vector<1x8x128xf32> to vector<8x128xf32>
    %c0_12 = arith.constant 0 : index
    %c0_13 = arith.constant 0 : index
    %40 = vector.load %arg2[%c0_12, %c0_13] : memref<32x128xf32, #tpu.memory_space<vmem>>, vector<32x128xf32>
    %cst_14 = arith.constant dense<0.000000e+00> : vector<8x128xf32>
    %41 = tpu.matmul %32, %40, %cst_14 {dimension_numbers = #tpu.dot_dimension_numbers<[1], [0], [0], [1], [0, 0, 1, 1], [], []>} : vector<8x32xf32>, vector<32x128xf32>, vector<8x128xf32> -> vector<8x128xf32>
    %42 = arith.addf %39, %41 : vector<8x128xf32>
    %43 = vector.extract_strided_slice %42 {offsets = [0, 0], sizes = [8, 32], strides = [1, 1]} : vector<8x128xf32> to vector<8x32xf32>
    %44 = arith.negf %43 : vector<8x32xf32>
    %45 = math.exp %44 : vector<8x32xf32>
    %cst_15 = arith.constant 1.000000e+00 : f32
    %46 = vector.broadcast %cst_15 : f32 to vector<8x32xf32>
    %47 = arith.addf %46, %45 : vector<8x32xf32>
    %48 = arith.divf %46, %47 : vector<8x32xf32>
    %49 = vector.extract_strided_slice %42 {offsets = [0, 32], sizes = [8, 32], strides = [1, 1]} : vector<8x128xf32> to vector<8x32xf32>
    %50 = arith.negf %49 : vector<8x32xf32>
    %51 = math.exp %50 : vector<8x32xf32>
    %cst_16 = arith.constant 1.000000e+00 : f32
    %52 = vector.broadcast %cst_16 : f32 to vector<8x32xf32>
    %53 = arith.addf %52, %51 : vector<8x32xf32>
    %54 = arith.divf %52, %53 : vector<8x32xf32>
    %55 = vector.extract_strided_slice %42 {offsets = [0, 64], sizes = [8, 32], strides = [1, 1]} : vector<8x128xf32> to vector<8x32xf32>
    %56 = math.tanh %55 : vector<8x32xf32>
    %57 = vector.extract_strided_slice %42 {offsets = [0, 96], sizes = [8, 32], strides = [1, 1]} : vector<8x128xf32> to vector<8x32xf32>
    %58 = arith.negf %57 : vector<8x32xf32>
    %59 = math.exp %58 : vector<8x32xf32>
    %cst_17 = arith.constant 1.000000e+00 : f32
    %60 = vector.broadcast %cst_17 : f32 to vector<8x32xf32>
    %61 = arith.addf %60, %59 : vector<8x32xf32>
    %62 = arith.divf %60, %61 : vector<8x32xf32>
    %63 = arith.mulf %54, %30 : vector<8x32xf32>
    %64 = arith.mulf %48, %56 : vector<8x32xf32>
    %65 = arith.addf %63, %64 : vector<8x32xf32>
    %66 = math.tanh %65 : vector<8x32xf32>
    %67 = arith.mulf %62, %66 : vector<8x32xf32>
    %68 = arith.index_cast %c1_i32 : i32 to index
    %c0_18 = arith.constant 0 : index
    %c0_19 = arith.constant 0 : index
    %69 = vector.load %arg3[%68, %c0_18, %c0_19] : memref<8x8x32xf32, #tpu.memory_space<vmem>>, vector<1x8x32xf32>
    %70 = vector.shape_cast %69 : vector<1x8x32xf32> to vector<8x32xf32>
    %71 = vector.shape_cast %67 : vector<8x32xf32> to vector<1x8x32xf32>
    tpu.vector_store %arg3[%68, %c0_18, %c0_19], %71 {strides = array<i32>} : memref<8x8x32xf32, #tpu.memory_space<vmem>>, vector<1x8x32xf32>,
    %c2_i32 = arith.constant 2 : i32
    %72 = arith.index_cast %c2_i32 : i32 to index
    %c0_20 = arith.constant 0 : index
    %c0_21 = arith.constant 0 : index
    %73 = vector.load %arg1[%72, %c0_20, %c0_21] : memref<8x8x128xf32, #tpu.memory_space<vmem>>, vector<1x8x128xf32>
    %74 = vector.shape_cast %73 : vector<1x8x128xf32> to vector<8x128xf32>
    %c0_22 = arith.constant 0 : index
    %c0_23 = arith.constant 0 : index
    %75 = vector.load %arg2[%c0_22, %c0_23] : memref<32x128xf32, #tpu.memory_space<vmem>>, vector<32x128xf32>
    %cst_24 = arith.constant dense<0.000000e+00> : vector<8x128xf32>
    %76 = tpu.matmul %67, %75, %cst_24 {dimension_numbers = #tpu.dot_dimension_numbers<[1], [0], [0], [1], [0, 0, 1, 1], [], []>} : vector<8x32xf32>, vector<32x128xf32>, vector<8x128xf32> -> vector<8x128xf32>
    %77 = arith.addf %74, %76 : vector<8x128xf32>
    %78 = vector.extract_strided_slice %77 {offsets = [0, 0], sizes = [8, 32], strides = [1, 1]} : vector<8x128xf32> to vector<8x32xf32>
    %79 = arith.negf %78 : vector<8x32xf32>
    %80 = math.exp %79 : vector<8x32xf32>
    %cst_25 = arith.constant 1.000000e+00 : f32
    %81 = vector.broadcast %cst_25 : f32 to vector<8x32xf32>
    %82 = arith.addf %81, %80 : vector<8x32xf32>
    %83 = arith.divf %81, %82 : vector<8x32xf32>
    %84 = vector.extract_strided_slice %77 {offsets = [0, 32], sizes = [8, 32], strides = [1, 1]} : vector<8x128xf32> to vector<8x32xf32>
    %85 = arith.negf %84 : vector<8x32xf32>
    %86 = math.exp %85 : vector<8x32xf32>
    %cst_26 = arith.constant 1.000000e+00 : f32
    %87 = vector.broadcast %cst_26 : f32 to vector<8x32xf32>
    %88 = arith.addf %87, %86 : vector<8x32xf32>
    %89 = arith.divf %87, %88 : vector<8x32xf32>
    %90 = vector.extract_strided_slice %77 {offsets = [0, 64], sizes = [8, 32], strides = [1, 1]} : vector<8x128xf32> to vector<8x32xf32>
    %91 = math.tanh %90 : vector<8x32xf32>
    %92 = vector.extract_strided_slice %77 {offsets = [0, 96], sizes = [8, 32], strides = [1, 1]} : vector<8x128xf32> to vector<8x32xf32>
    %93 = arith.negf %92 : vector<8x32xf32>
    %94 = math.exp %93 : vector<8x32xf32>
    %cst_27 = arith.constant 1.000000e+00 : f32
    %95 = vector.broadcast %cst_27 : f32 to vector<8x32xf32>
    %96 = arith.addf %95, %94 : vector<8x32xf32>
    %97 = arith.divf %95, %96 : vector<8x32xf32>
    %98 = arith.mulf %89, %65 : vector<8x32xf32>
    %99 = arith.mulf %83, %91 : vector<8x32xf32>
    %100 = arith.addf %98, %99 : vector<8x32xf32>
    %101 = math.tanh %100 : vector<8x32xf32>
    %102 = arith.mulf %97, %101 : vector<8x32xf32>
    %103 = arith.index_cast %c2_i32 : i32 to index
    %c0_28 = arith.constant 0 : index
    %c0_29 = arith.constant 0 : index
    %104 = vector.load %arg3[%103, %c0_28, %c0_29] : memref<8x8x32xf32, #tpu.memory_space<vmem>>, vector<1x8x32xf32>
    %105 = vector.shape_cast %104 : vector<1x8x32xf32> to vector<8x32xf32>
    %106 = vector.shape_cast %102 : vector<8x32xf32> to vector<1x8x32xf32>
    tpu.vector_store %arg3[%103, %c0_28, %c0_29], %106 {strides = array<i32>} : memref<8x8x32xf32, #tpu.memory_space<vmem>>, vector<1x8x32xf32>,
    %c3_i32 = arith.constant 3 : i32
    %107 = arith.index_cast %c3_i32 : i32 to index
    %c0_30 = arith.constant 0 : index
    %c0_31 = arith.constant 0 : index
    %108 = vector.load %arg1[%107, %c0_30, %c0_31] : memref<8x8x128xf32, #tpu.memory_space<vmem>>, vector<1x8x128xf32>
    %109 = vector.shape_cast %108 : vector<1x8x128xf32> to vector<8x128xf32>
    %c0_32 = arith.constant 0 : index
    %c0_33 = arith.constant 0 : index
    %110 = vector.load %arg2[%c0_32, %c0_33] : memref<32x128xf32, #tpu.memory_space<vmem>>, vector<32x128xf32>
    %cst_34 = arith.constant dense<0.000000e+00> : vector<8x128xf32>
    %111 = tpu.matmul %102, %110, %cst_34 {dimension_numbers = #tpu.dot_dimension_numbers<[1], [0], [0], [1], [0, 0, 1, 1], [], []>} : vector<8x32xf32>, vector<32x128xf32>, vector<8x128xf32> -> vector<8x128xf32>
    %112 = arith.addf %109, %111 : vector<8x128xf32>
    %113 = vector.extract_strided_slice %112 {offsets = [0, 0], sizes = [8, 32], strides = [1, 1]} : vector<8x128xf32> to vector<8x32xf32>
    %114 = arith.negf %113 : vector<8x32xf32>
    %115 = math.exp %114 : vector<8x32xf32>
    %cst_35 = arith.constant 1.000000e+00 : f32
    %116 = vector.broadcast %cst_35 : f32 to vector<8x32xf32>
    %117 = arith.addf %116, %115 : vector<8x32xf32>
    %118 = arith.divf %116, %117 : vector<8x32xf32>
    %119 = vector.extract_strided_slice %112 {offsets = [0, 32], sizes = [8, 32], strides = [1, 1]} : vector<8x128xf32> to vector<8x32xf32>
    %120 = arith.negf %119 : vector<8x32xf32>
    %121 = math.exp %120 : vector<8x32xf32>
    %cst_36 = arith.constant 1.000000e+00 : f32
    %122 = vector.broadcast %cst_36 : f32 to vector<8x32xf32>
    %123 = arith.addf %122, %121 : vector<8x32xf32>
    %124 = arith.divf %122, %123 : vector<8x32xf32>
    %125 = vector.extract_strided_slice %112 {offsets = [0, 64], sizes = [8, 32], strides = [1, 1]} : vector<8x128xf32> to vector<8x32xf32>
    %126 = math.tanh %125 : vector<8x32xf32>
    %127 = vector.extract_strided_slice %112 {offsets = [0, 96], sizes = [8, 32], strides = [1, 1]} : vector<8x128xf32> to vector<8x32xf32>
    %128 = arith.negf %127 : vector<8x32xf32>
    %129 = math.exp %128 : vector<8x32xf32>
    %cst_37 = arith.constant 1.000000e+00 : f32
    %130 = vector.broadcast %cst_37 : f32 to vector<8x32xf32>
    %131 = arith.addf %130, %129 : vector<8x32xf32>
    %132 = arith.divf %130, %131 : vector<8x32xf32>
    %133 = arith.mulf %124, %100 : vector<8x32xf32>
    %134 = arith.mulf %118, %126 : vector<8x32xf32>
    %135 = arith.addf %133, %134 : vector<8x32xf32>
    %136 = math.tanh %135 : vector<8x32xf32>
    %137 = arith.mulf %132, %136 : vector<8x32xf32>
    %138 = arith.index_cast %c3_i32 : i32 to index
    %c0_38 = arith.constant 0 : index
    %c0_39 = arith.constant 0 : index
    %139 = vector.load %arg3[%138, %c0_38, %c0_39] : memref<8x8x32xf32, #tpu.memory_space<vmem>>, vector<1x8x32xf32>
    %140 = vector.shape_cast %139 : vector<1x8x32xf32> to vector<8x32xf32>
    %141 = vector.shape_cast %137 : vector<8x32xf32> to vector<1x8x32xf32>
    tpu.vector_store %arg3[%138, %c0_38, %c0_39], %141 {strides = array<i32>} : memref<8x8x32xf32, #tpu.memory_space<vmem>>, vector<1x8x32xf32>,
    %c4_i32 = arith.constant 4 : i32
    %142 = arith.index_cast %c4_i32 : i32 to index
    %c0_40 = arith.constant 0 : index
    %c0_41 = arith.constant 0 : index
    %143 = vector.load %arg1[%142, %c0_40, %c0_41] : memref<8x8x128xf32, #tpu.memory_space<vmem>>, vector<1x8x128xf32>
    %144 = vector.shape_cast %143 : vector<1x8x128xf32> to vector<8x128xf32>
    %c0_42 = arith.constant 0 : index
    %c0_43 = arith.constant 0 : index
    %145 = vector.load %arg2[%c0_42, %c0_43] : memref<32x128xf32, #tpu.memory_space<vmem>>, vector<32x128xf32>
    %cst_44 = arith.constant dense<0.000000e+00> : vector<8x128xf32>
    %146 = tpu.matmul %137, %145, %cst_44 {dimension_numbers = #tpu.dot_dimension_numbers<[1], [0], [0], [1], [0, 0, 1, 1], [], []>} : vector<8x32xf32>, vector<32x128xf32>, vector<8x128xf32> -> vector<8x128xf32>
    %147 = arith.addf %144, %146 : vector<8x128xf32>
    %148 = vector.extract_strided_slice %147 {offsets = [0, 0], sizes = [8, 32], strides = [1, 1]} : vector<8x128xf32> to vector<8x32xf32>
    %149 = arith.negf %148 : vector<8x32xf32>
    %150 = math.exp %149 : vector<8x32xf32>
    %cst_45 = arith.constant 1.000000e+00 : f32
    %151 = vector.broadcast %cst_45 : f32 to vector<8x32xf32>
    %152 = arith.addf %151, %150 : vector<8x32xf32>
    %153 = arith.divf %151, %152 : vector<8x32xf32>
    %154 = vector.extract_strided_slice %147 {offsets = [0, 32], sizes = [8, 32], strides = [1, 1]} : vector<8x128xf32> to vector<8x32xf32>
    %155 = arith.negf %154 : vector<8x32xf32>
    %156 = math.exp %155 : vector<8x32xf32>
    %cst_46 = arith.constant 1.000000e+00 : f32
    %157 = vector.broadcast %cst_46 : f32 to vector<8x32xf32>
    %158 = arith.addf %157, %156 : vector<8x32xf32>
    %159 = arith.divf %157, %158 : vector<8x32xf32>
    %160 = vector.extract_strided_slice %147 {offsets = [0, 64], sizes = [8, 32], strides = [1, 1]} : vector<8x128xf32> to vector<8x32xf32>
    %161 = math.tanh %160 : vector<8x32xf32>
    %162 = vector.extract_strided_slice %147 {offsets = [0, 96], sizes = [8, 32], strides = [1, 1]} : vector<8x128xf32> to vector<8x32xf32>
    %163 = arith.negf %162 : vector<8x32xf32>
    %164 = math.exp %163 : vector<8x32xf32>
    %cst_47 = arith.constant 1.000000e+00 : f32
    %165 = vector.broadcast %cst_47 : f32 to vector<8x32xf32>
    %166 = arith.addf %165, %164 : vector<8x32xf32>
    %167 = arith.divf %165, %166 : vector<8x32xf32>
    %168 = arith.mulf %159, %135 : vector<8x32xf32>
    %169 = arith.mulf %153, %161 : vector<8x32xf32>
    %170 = arith.addf %168, %169 : vector<8x32xf32>
    %171 = math.tanh %170 : vector<8x32xf32>
    %172 = arith.mulf %167, %171 : vector<8x32xf32>
    %173 = arith.index_cast %c4_i32 : i32 to index
    %c0_48 = arith.constant 0 : index
    %c0_49 = arith.constant 0 : index
    %174 = vector.load %arg3[%173, %c0_48, %c0_49] : memref<8x8x32xf32, #tpu.memory_space<vmem>>, vector<1x8x32xf32>
    %175 = vector.shape_cast %174 : vector<1x8x32xf32> to vector<8x32xf32>
    %176 = vector.shape_cast %172 : vector<8x32xf32> to vector<1x8x32xf32>
    tpu.vector_store %arg3[%173, %c0_48, %c0_49], %176 {strides = array<i32>} : memref<8x8x32xf32, #tpu.memory_space<vmem>>, vector<1x8x32xf32>,
    %c5_i32 = arith.constant 5 : i32
    %177 = arith.index_cast %c5_i32 : i32 to index
    %c0_50 = arith.constant 0 : index
    %c0_51 = arith.constant 0 : index
    %178 = vector.load %arg1[%177, %c0_50, %c0_51] : memref<8x8x128xf32, #tpu.memory_space<vmem>>, vector<1x8x128xf32>
    %179 = vector.shape_cast %178 : vector<1x8x128xf32> to vector<8x128xf32>
    %c0_52 = arith.constant 0 : index
    %c0_53 = arith.constant 0 : index
    %180 = vector.load %arg2[%c0_52, %c0_53] : memref<32x128xf32, #tpu.memory_space<vmem>>, vector<32x128xf32>
    %cst_54 = arith.constant dense<0.000000e+00> : vector<8x128xf32>
    %181 = tpu.matmul %172, %180, %cst_54 {dimension_numbers = #tpu.dot_dimension_numbers<[1], [0], [0], [1], [0, 0, 1, 1], [], []>} : vector<8x32xf32>, vector<32x128xf32>, vector<8x128xf32> -> vector<8x128xf32>
    %182 = arith.addf %179, %181 : vector<8x128xf32>
    %183 = vector.extract_strided_slice %182 {offsets = [0, 0], sizes = [8, 32], strides = [1, 1]} : vector<8x128xf32> to vector<8x32xf32>
    %184 = arith.negf %183 : vector<8x32xf32>
    %185 = math.exp %184 : vector<8x32xf32>
    %cst_55 = arith.constant 1.000000e+00 : f32
    %186 = vector.broadcast %cst_55 : f32 to vector<8x32xf32>
    %187 = arith.addf %186, %185 : vector<8x32xf32>
    %188 = arith.divf %186, %187 : vector<8x32xf32>
    %189 = vector.extract_strided_slice %182 {offsets = [0, 32], sizes = [8, 32], strides = [1, 1]} : vector<8x128xf32> to vector<8x32xf32>
    %190 = arith.negf %189 : vector<8x32xf32>
    %191 = math.exp %190 : vector<8x32xf32>
    %cst_56 = arith.constant 1.000000e+00 : f32
    %192 = vector.broadcast %cst_56 : f32 to vector<8x32xf32>
    %193 = arith.addf %192, %191 : vector<8x32xf32>
    %194 = arith.divf %192, %193 : vector<8x32xf32>
    %195 = vector.extract_strided_slice %182 {offsets = [0, 64], sizes = [8, 32], strides = [1, 1]} : vector<8x128xf32> to vector<8x32xf32>
    %196 = math.tanh %195 : vector<8x32xf32>
    %197 = vector.extract_strided_slice %182 {offsets = [0, 96], sizes = [8, 32], strides = [1, 1]} : vector<8x128xf32> to vector<8x32xf32>
    %198 = arith.negf %197 : vector<8x32xf32>
    %199 = math.exp %198 : vector<8x32xf32>
    %cst_57 = arith.constant 1.000000e+00 : f32
    %200 = vector.broadcast %cst_57 : f32 to vector<8x32xf32>
    %201 = arith.addf %200, %199 : vector<8x32xf32>
    %202 = arith.divf %200, %201 : vector<8x32xf32>
    %203 = arith.mulf %194, %170 : vector<8x32xf32>
    %204 = arith.mulf %188, %196 : vector<8x32xf32>
    %205 = arith.addf %203, %204 : vector<8x32xf32>
    %206 = math.tanh %205 : vector<8x32xf32>
    %207 = arith.mulf %202, %206 : vector<8x32xf32>
    %208 = arith.index_cast %c5_i32 : i32 to index
    %c0_58 = arith.constant 0 : index
    %c0_59 = arith.constant 0 : index
    %209 = vector.load %arg3[%208, %c0_58, %c0_59] : memref<8x8x32xf32, #tpu.memory_space<vmem>>, vector<1x8x32xf32>
    %210 = vector.shape_cast %209 : vector<1x8x32xf32> to vector<8x32xf32>
    %211 = vector.shape_cast %207 : vector<8x32xf32> to vector<1x8x32xf32>
    tpu.vector_store %arg3[%208, %c0_58, %c0_59], %211 {strides = array<i32>} : memref<8x8x32xf32, #tpu.memory_space<vmem>>, vector<1x8x32xf32>,
    %c6_i32 = arith.constant 6 : i32
    %212 = arith.index_cast %c6_i32 : i32 to index
    %c0_60 = arith.constant 0 : index
    %c0_61 = arith.constant 0 : index
    %213 = vector.load %arg1[%212, %c0_60, %c0_61] : memref<8x8x128xf32, #tpu.memory_space<vmem>>, vector<1x8x128xf32>
    %214 = vector.shape_cast %213 : vector<1x8x128xf32> to vector<8x128xf32>
    %c0_62 = arith.constant 0 : index
    %c0_63 = arith.constant 0 : index
    %215 = vector.load %arg2[%c0_62, %c0_63] : memref<32x128xf32, #tpu.memory_space<vmem>>, vector<32x128xf32>
    %cst_64 = arith.constant dense<0.000000e+00> : vector<8x128xf32>
    %216 = tpu.matmul %207, %215, %cst_64 {dimension_numbers = #tpu.dot_dimension_numbers<[1], [0], [0], [1], [0, 0, 1, 1], [], []>} : vector<8x32xf32>, vector<32x128xf32>, vector<8x128xf32> -> vector<8x128xf32>
    %217 = arith.addf %214, %216 : vector<8x128xf32>
    %218 = vector.extract_strided_slice %217 {offsets = [0, 0], sizes = [8, 32], strides = [1, 1]} : vector<8x128xf32> to vector<8x32xf32>
    %219 = arith.negf %218 : vector<8x32xf32>
    %220 = math.exp %219 : vector<8x32xf32>
    %cst_65 = arith.constant 1.000000e+00 : f32
    %221 = vector.broadcast %cst_65 : f32 to vector<8x32xf32>
    %222 = arith.addf %221, %220 : vector<8x32xf32>
    %223 = arith.divf %221, %222 : vector<8x32xf32>
    %224 = vector.extract_strided_slice %217 {offsets = [0, 32], sizes = [8, 32], strides = [1, 1]} : vector<8x128xf32> to vector<8x32xf32>
    %225 = arith.negf %224 : vector<8x32xf32>
    %226 = math.exp %225 : vector<8x32xf32>
    %cst_66 = arith.constant 1.000000e+00 : f32
    %227 = vector.broadcast %cst_66 : f32 to vector<8x32xf32>
    %228 = arith.addf %227, %226 : vector<8x32xf32>
    %229 = arith.divf %227, %228 : vector<8x32xf32>
    %230 = vector.extract_strided_slice %217 {offsets = [0, 64], sizes = [8, 32], strides = [1, 1]} : vector<8x128xf32> to vector<8x32xf32>
    %231 = math.tanh %230 : vector<8x32xf32>
    %232 = vector.extract_strided_slice %217 {offsets = [0, 96], sizes = [8, 32], strides = [1, 1]} : vector<8x128xf32> to vector<8x32xf32>
    %233 = arith.negf %232 : vector<8x32xf32>
    %234 = math.exp %233 : vector<8x32xf32>
    %cst_67 = arith.constant 1.000000e+00 : f32
    %235 = vector.broadcast %cst_67 : f32 to vector<8x32xf32>
    %236 = arith.addf %235, %234 : vector<8x32xf32>
    %237 = arith.divf %235, %236 : vector<8x32xf32>
    %238 = arith.mulf %229, %205 : vector<8x32xf32>
    %239 = arith.mulf %223, %231 : vector<8x32xf32>
    %240 = arith.addf %238, %239 : vector<8x32xf32>
    %241 = math.tanh %240 : vector<8x32xf32>
    %242 = arith.mulf %237, %241 : vector<8x32xf32>
    %243 = arith.index_cast %c6_i32 : i32 to index
    %c0_68 = arith.constant 0 : index
    %c0_69 = arith.constant 0 : index
    %244 = vector.load %arg3[%243, %c0_68, %c0_69] : memref<8x8x32xf32, #tpu.memory_space<vmem>>, vector<1x8x32xf32>
    %245 = vector.shape_cast %244 : vector<1x8x32xf32> to vector<8x32xf32>
    %246 = vector.shape_cast %242 : vector<8x32xf32> to vector<1x8x32xf32>
    tpu.vector_store %arg3[%243, %c0_68, %c0_69], %246 {strides = array<i32>} : memref<8x8x32xf32, #tpu.memory_space<vmem>>, vector<1x8x32xf32>,
    %c7_i32 = arith.constant 7 : i32
    %247 = arith.index_cast %c7_i32 : i32 to index
    %c0_70 = arith.constant 0 : index
    %c0_71 = arith.constant 0 : index
    %248 = vector.load %arg1[%247, %c0_70, %c0_71] : memref<8x8x128xf32, #tpu.memory_space<vmem>>, vector<1x8x128xf32>
    %249 = vector.shape_cast %248 : vector<1x8x128xf32> to vector<8x128xf32>
    %c0_72 = arith.constant 0 : index
    %c0_73 = arith.constant 0 : index
    %250 = vector.load %arg2[%c0_72, %c0_73] : memref<32x128xf32, #tpu.memory_space<vmem>>, vector<32x128xf32>
    %cst_74 = arith.constant dense<0.000000e+00> : vector<8x128xf32>
    %251 = tpu.matmul %242, %250, %cst_74 {dimension_numbers = #tpu.dot_dimension_numbers<[1], [0], [0], [1], [0, 0, 1, 1], [], []>} : vector<8x32xf32>, vector<32x128xf32>, vector<8x128xf32> -> vector<8x128xf32>
    %252 = arith.addf %249, %251 : vector<8x128xf32>
    %253 = vector.extract_strided_slice %252 {offsets = [0, 0], sizes = [8, 32], strides = [1, 1]} : vector<8x128xf32> to vector<8x32xf32>
    %254 = arith.negf %253 : vector<8x32xf32>
    %255 = math.exp %254 : vector<8x32xf32>
    %cst_75 = arith.constant 1.000000e+00 : f32
    %256 = vector.broadcast %cst_75 : f32 to vector<8x32xf32>
    %257 = arith.addf %256, %255 : vector<8x32xf32>
    %258 = arith.divf %256, %257 : vector<8x32xf32>
    %259 = vector.extract_strided_slice %252 {offsets = [0, 32], sizes = [8, 32], strides = [1, 1]} : vector<8x128xf32> to vector<8x32xf32>
    %260 = arith.negf %259 : vector<8x32xf32>
    %261 = math.exp %260 : vector<8x32xf32>
    %cst_76 = arith.constant 1.000000e+00 : f32
    %262 = vector.broadcast %cst_76 : f32 to vector<8x32xf32>
    %263 = arith.addf %262, %261 : vector<8x32xf32>
    %264 = arith.divf %262, %263 : vector<8x32xf32>
    %265 = vector.extract_strided_slice %252 {offsets = [0, 64], sizes = [8, 32], strides = [1, 1]} : vector<8x128xf32> to vector<8x32xf32>
    %266 = math.tanh %265 : vector<8x32xf32>
    %267 = vector.extract_strided_slice %252 {offsets = [0, 96], sizes = [8, 32], strides = [1, 1]} : vector<8x128xf32> to vector<8x32xf32>
    %268 = arith.negf %267 : vector<8x32xf32>
    %269 = math.exp %268 : vector<8x32xf32>
    %cst_77 = arith.constant 1.000000e+00 : f32
    %270 = vector.broadcast %cst_77 : f32 to vector<8x32xf32>
    %271 = arith.addf %270, %269 : vector<8x32xf32>
    %272 = arith.divf %270, %271 : vector<8x32xf32>
    %273 = arith.mulf %264, %240 : vector<8x32xf32>
    %274 = arith.mulf %258, %266 : vector<8x32xf32>
    %275 = arith.addf %273, %274 : vector<8x32xf32>
    %276 = math.tanh %275 : vector<8x32xf32>
    %277 = arith.mulf %272, %276 : vector<8x32xf32>
    %278 = arith.index_cast %c7_i32 : i32 to index
    %c0_78 = arith.constant 0 : index
    %c0_79 = arith.constant 0 : index
    %279 = vector.load %arg3[%278, %c0_78, %c0_79] : memref<8x8x32xf32, #tpu.memory_space<vmem>>, vector<1x8x32xf32>
    %280 = vector.shape_cast %279 : vector<1x8x32xf32> to vector<8x32xf32>
    %281 = vector.shape_cast %277 : vector<8x32xf32> to vector<1x8x32xf32>
    tpu.vector_store %arg3[%278, %c0_78, %c0_79], %281 {strides = array<i32>} : memref<8x8x32xf32, #tpu.memory_space<vmem>>, vector<1x8x32xf32>,
    %c8_i32 = arith.constant 8 : i32
    return
  }
  func.func @transform_0(%arg0: i32) -> (i32, i32, i32) {
    %c0_i32 = arith.constant 0 : i32
    %c0_i32_0 = arith.constant 0 : i32
    %c0_i32_1 = arith.constant 0 : i32
    %c0_i32_2 = arith.constant 0 : i32
    return %c0_i32, %c0_i32_0, %c0_i32_1 : i32, i32, i32
  }
  func.func @transform_1(%arg0: i32) -> (i32, i32) {
    %c0_i32 = arith.constant 0 : i32
    %c0_i32_0 = arith.constant 0 : i32
    %c0_i32_1 = arith.constant 0 : i32
    return %c0_i32, %c0_i32_0 : i32, i32
  }
  func.func @transform_2(%arg0: i32) -> (i32, i32, i32) {
    %c0_i32 = arith.constant 0 : i32
    %c0_i32_0 = arith.constant 0 : i32
    %c0_i32_1 = arith.constant 0 : i32
    %c0_i32_2 = arith.constant 0 : i32
    return %c0_i32, %c0_i32_0, %c0_i32_1 : i32, i32, i32
  }
}

</mosaic_0001>

<llo_original>
// kernel: decoder_rnn_forward.1
$region0: #{decoder_rnn_forward.1}
  #allocation0 [shape = 'u32[]', space=smem, size = 0x4, offset = 0x4, fixed_abs, tag = 'smem constant byte address 0x4 - core index']
  #allocation1 [shape = 'u32[144,128]{1,0:T(1,128)}', space=vmem, size = 0x12000, scoped, tag = 'internal scratch']
  %s0 = inlined_call_operand.vmem [shape: f32[8,8,128], index: 0, kind: input, shape index: {}]
  %s1 = inlined_call_operand.vmem [shape: f32[32,128], index: 1, kind: input, shape index: {}]
  %s2 = inlined_call_operand.vmem [shape: f32[8,8,32], index: 2, kind: output, shape index: {}]
  %s3 = sld [smem:[#allocation0]]
  $region18: #{decoder_rnn_forward.1} parent=0
    _
  %s5 = ssub.s32 1, %s3
  %s6 = scalar_select 0, %s5, %s3
  // Predicated region
  $region2: #{decoder_rnn_forward.1} parent=0 // pred_check
    _
  $region3: #{decoder_rnn_forward.1} parent=0 // pred_check_branch
    %8 = sbr.rel (0) target = $region5
  $region4: #{decoder_rnn_forward.1} parent=0 // pred_region
    _
  $region5: #{decoder_rnn_forward.1} parent=0 // pred_fallthru
    _
  // Predicated region
  $region6: #{decoder_rnn_forward.1} parent=0 // pred_check
    _
  $region7: #{decoder_rnn_forward.1} parent=0 // pred_check_branch
    %10 = sbr.rel (0) target = $region9
  $region8: #{decoder_rnn_forward.1} parent=0 // pred_region
    _
  $region9: #{decoder_rnn_forward.1} parent=0 // pred_fallthru
    _
  %v11 = vld [vmem:[%s0] sm:$0xff]
  %v12 = vld [vmem:[%s1] sm:$0xff]
  %v13 = vld [vmem:[%s1 + $0x8] sm:$0xff]
  %v14 = vld [vmem:[%s1 + $0x10] sm:$0xff]
  %v15 = vld [vmem:[%s1 + $0x18] sm:$0xff]
  %vm16 = vcmask 261120
  %v18 = vsel %vm16, 0.0, 0
  %20 = vmatprep.subr.mxu0 0.0
  %21 = vmatpush1.msra.mxu0 0.0
  %22 = vmatprep.subr.mxu0 0.0
  %23 = vmatpush1.msra.mxu0 0.0
  %24 = vmatprep.subr.mxu0 0.0
  %25 = vmatpush1.msra.mxu0 0.0
  %26 = vmatprep.subr.mxu0 0.0
  %27 = vmatpush1.msra.mxu0 0.0
  %28 = vmatprep.subr.mxu0 0.0
  %29 = vmatpush1.msra.mxu0 0.0
  %30 = vmatprep.subr.mxu0 0.0
  %31 = vmatpush1.msra.mxu0 0.0
  %32 = vmatprep.subr.mxu0 0.0
  %33 = vmatpush1.msra.mxu0 0.0
  %34 = vmatprep.subr.mxu0 0.0
  %35 = vmatpush1.msra.mxu0 0.0
  %36 = vmatprep.subr.mxu0 0.0
  %37 = vmatpush1.msra.mxu0 0.0
  %38 = vmatprep.subr.mxu0 0.0
  %39 = vmatpush1.msra.mxu0 0.0
  %40 = vmatprep.subr.mxu0 0.0
  %41 = vmatpush1.msra.mxu0 0.0
  %42 = vmatprep.subr.mxu0 0.0
  %43 = vmatpush1.msra.mxu0 0.0
  %44 = vmatprep.subr.mxu0 0.0
  %45 = vmatpush1.msra.mxu0 %v15
  %46 = vmatprep.subr.mxu0 0.0
  %47 = vmatpush1.msra.mxu0 %v14
  %48 = vmatprep.subr.mxu0 0.0
  %49 = vmatpush1.msra.mxu0 %v13
  %50 = vmatprep.subr.mxu0 0.0
  %51 = vmatpush1.msra.mxu0 %v12
  %52 = vmatprep.subr.mxu0 0.0
  %53 = vmatpush2.msra.mxu0 0.0
  %54 = vmatprep.subr.mxu0 0.0
  %55 = vmatpush2.msra.mxu0 0.0
  %56 = vmatprep.subr.mxu0 0.0
  %57 = vmatpush2.msra.mxu0 0.0
  %58 = vmatprep.subr.mxu0 0.0
  %59 = vmatpush2.msra.mxu0 0.0
  %60 = vmatprep.subr.mxu0 0.0
  %61 = vmatpush2.msra.mxu0 0.0
  %62 = vmatprep.subr.mxu0 0.0
  %63 = vmatpush2.msra.mxu0 0.0
  %64 = vmatprep.subr.mxu0 0.0
  %65 = vmatpush2.msra.mxu0 0.0
  %66 = vmatprep.subr.mxu0 0.0
  %67 = vmatpush2.msra.mxu0 0.0
  %68 = vmatprep.subr.mxu0 0.0
  %69 = vmatpush2.msra.mxu0 0.0
  %70 = vmatprep.subr.mxu0 0.0
  %71 = vmatpush2.msra.mxu0 0.0
  %72 = vmatprep.subr.mxu0 0.0
  %73 = vmatpush2.msra.mxu0 0.0
  %74 = vmatprep.subr.mxu0 0.0
  %75 = vmatpush2.msra.mxu0 0.0
  %76 = vmatprep.subr.mxu0 0.0
  %77 = vmatpush2.msra.mxu0 0.0
  %78 = vmatprep.subr.mxu0 0.0
  %79 = vmatpush2.msra.mxu0 0.0
  %80 = vmatprep.subr.mxu0 0.0
  %81 = vmatpush2.msra.mxu0 0.0
  %82 = vmatprep.subr.mxu0 0.0
  %83 = vmatpush2.msra.mxu0 0.0
  %84 = vmatprep.mubr.f32.mxu0 0.0
  %85 = vmatmul.mubr.f32.gmra.mxu0 %v18
  %v86 = vpop.f32.mrf.mxu0
  %v87 = vadd.f32 0.0, %v86
  %v88 = vpop.f32.mrf.mxu0
  %89 = vdwg.mxu0
  %v90 = vadd.f32 %v11, %v87
  %v91 = vxor.u32 %v90, 2147483648
  %v92 = vmul.f32 %v91, 1.442695
  %v93 = vpow.pop %v92
  %v94 = vadd.f32 %v93, 1.0
  %v95 = vrcp.pop %v94
  %v96 = vmul.f32 1.0, %v95
  %v97 = vtanh.pop %v90
  %v98 = vmul.f32 %v96, 0.0
  %100 = vrot.lane.b32.xlu0 %v97, 64
  %v101 = vpop.permute.xlu0 %100
  %v103 = vmul.f32 %v96, %v101
  %105 = vrot.lane.b32.xlu0 %v103, 32
  %v106 = vpop.permute.xlu0 %105
  %v108 = vadd.f32 %v98, %v106
  %v109 = vtanh.pop %v108
  %111 = vrot.lane.b32.xlu0 %v109, 64
  %v112 = vpop.permute.xlu0 %111
  %v114 = vmul.f32 %v96, %v112
  %116 = vrot.lane.b32.xlu0 %v114, 32
  %v117 = vpop.permute.xlu0 %116
  %119 = vst.msk [vmem:[%s2] sm:$0xff] %vm16, %v117
  %s120 = scalar_lea.vmem %s0, 8
  %v121 = vld [vmem:[%s120] sm:$0xff]
  %v122 = vld [vmem:[%s1] sm:$0xff]
  %v123 = vld [vmem:[%s1 + $0x8] sm:$0xff]
  %v124 = vld [vmem:[%s1 + $0x10] sm:$0xff]
  %v125 = vld [vmem:[%s1 + $0x18] sm:$0xff]
  %v126 = vsel %vm16, %v117, 0
  %128 = vmatprep.subr.mxu0 0.0
  %129 = vmatpush1.msra.mxu0 0.0
  %130 = vmatprep.subr.mxu0 0.0
  %131 = vmatpush1.msra.mxu0 0.0
  %132 = vmatprep.subr.mxu0 0.0
  %133 = vmatpush1.msra.mxu0 0.0
  %134 = vmatprep.subr.mxu0 0.0
  %135 = vmatpush1.msra.mxu0 0.0
  %136 = vmatprep.subr.mxu0 0.0
  %137 = vmatpush1.msra.mxu0 0.0
  %138 = vmatprep.subr.mxu0 0.0
  %139 = vmatpush1.msra.mxu0 0.0
  %140 = vmatprep.subr.mxu0 0.0
  %141 = vmatpush1.msra.mxu0 0.0
  %142 = vmatprep.subr.mxu0 0.0
  %143 = vmatpush1.msra.mxu0 0.0
  %144 = vmatprep.subr.mxu0 0.0
  %145 = vmatpush1.msra.mxu0 0.0
  %146 = vmatprep.subr.mxu0 0.0
  %147 = vmatpush1.msra.mxu0 0.0
  %148 = vmatprep.subr.mxu0 0.0
  %149 = vmatpush1.msra.mxu0 0.0
  %150 = vmatprep.subr.mxu0 0.0
  %151 = vmatpush1.msra.mxu0 0.0
  %152 = vmatprep.subr.mxu0 0.0
  %153 = vmatpush1.msra.mxu0 %v125
  %154 = vmatprep.subr.mxu0 0.0
  %155 = vmatpush1.msra.mxu0 %v124
  %156 = vmatprep.subr.mxu0 0.0
  %157 = vmatpush1.msra.mxu0 %v123
  %158 = vmatprep.subr.mxu0 0.0
  %159 = vmatpush1.msra.mxu0 %v122
  %160 = vmatprep.subr.mxu0 0.0
  %161 = vmatpush2.msra.mxu0 0.0
  %162 = vmatprep.subr.mxu0 0.0
  %163 = vmatpush2.msra.mxu0 0.0
  %164 = vmatprep.subr.mxu0 0.0
  %165 = vmatpush2.msra.mxu0 0.0
  %166 = vmatprep.subr.mxu0 0.0
  %167 = vmatpush2.msra.mxu0 0.0
  %168 = vmatprep.subr.mxu0 0.0
  %169 = vmatpush2.msra.mxu0 0.0
  %170 = vmatprep.subr.mxu0 0.0
  %171 = vmatpush2.msra.mxu0 0.0
  %172 = vmatprep.subr.mxu0 0.0
  %173 = vmatpush2.msra.mxu0 0.0
  %174 = vmatprep.subr.mxu0 0.0
  %175 = vmatpush2.msra.mxu0 0.0
  %176 = vmatprep.subr.mxu0 0.0
  %177 = vmatpush2.msra.mxu0 0.0
  %178 = vmatprep.subr.mxu0 0.0
  %179 = vmatpush2.msra.mxu0 0.0
  %180 = vmatprep.subr.mxu0 0.0
  %181 = vmatpush2.msra.mxu0 0.0
  %182 = vmatprep.subr.mxu0 0.0
  %183 = vmatpush2.msra.mxu0 0.0
  %184 = vmatprep.subr.mxu0 0.0
  %185 = vmatpush2.msra.mxu0 0.0
  %186 = vmatprep.subr.mxu0 0.0
  %187 = vmatpush2.msra.mxu0 0.0
  %188 = vmatprep.subr.mxu0 0.0
  %189 = vmatpush2.msra.mxu0 0.0
  %190 = vmatprep.subr.mxu0 0.0
  %191 = vmatpush2.msra.mxu0 0.0
  %192 = vmatprep.mubr.f32.mxu0 0.0
  %193 = vmatmul.mubr.f32.gmra.mxu0 %v126
  %v194 = vpop.f32.mrf.mxu0
  %v195 = vadd.f32 0.0, %v194
  %v196 = vpop.f32.mrf.mxu0
  %197 = vdwg.mxu0
  %v198 = vadd.f32 %v121, %v195
  %v199 = vxor.u32 %v198, 2147483648
  %v200 = vmul.f32 %v199, 1.442695
  %v201 = vpow.pop %v200
  %v202 = vadd.f32 %v201, 1.0
  %v203 = vrcp.pop %v202
  %v204 = vmul.f32 1.0, %v203
  %v205 = vtanh.pop %v198
  %v206 = vmul.f32 %v204, %v108
  %208 = vrot.lane.b32.xlu0 %v205, 64
  %v209 = vpop.permute.xlu0 %208
  %v211 = vmul.f32 %v204, %v209
  %213 = vrot.lane.b32.xlu0 %v211, 32
  %v214 = vpop.permute.xlu0 %213
  %v216 = vadd.f32 %v206, %v214
  %v217 = vtanh.pop %v216
  %219 = vrot.lane.b32.xlu0 %v217, 64
  %v220 = vpop.permute.xlu0 %219
  %v222 = vmul.f32 %v204, %v220
  %224 = vrot.lane.b32.xlu0 %v222, 32
  %v225 = vpop.permute.xlu0 %224
  %s227 = scalar_lea.vmem %s2, 8
  %228 = vst.msk [vmem:[%s227] sm:$0xff] %vm16, %v225
  %s229 = scalar_lea.vmem %s0, 16
  %v230 = vld [vmem:[%s229] sm:$0xff]
  %v231 = vld [vmem:[%s1] sm:$0xff]
  %v232 = vld [vmem:[%s1 + $0x8] sm:$0xff]
  %v233 = vld [vmem:[%s1 + $0x10] sm:$0xff]
  %v234 = vld [vmem:[%s1 + $0x18] sm:$0xff]
  %v235 = vsel %vm16, %v225, 0
  %237 = vmatprep.subr.mxu0 0.0
  %238 = vmatpush1.msra.mxu0 0.0
  %239 = vmatprep.subr.mxu0 0.0
  %240 = vmatpush1.msra.mxu0 0.0
  %241 = vmatprep.subr.mxu0 0.0
  %242 = vmatpush1.msra.mxu0 0.0
  %243 = vmatprep.subr.mxu0 0.0
  %244 = vmatpush1.msra.mxu0 0.0
  %245 = vmatprep.subr.mxu0 0.0
  %246 = vmatpush1.msra.mxu0 0.0
  %247 = vmatprep.subr.mxu0 0.0
  %248 = vmatpush1.msra.mxu0 0.0
  %249 = vmatprep.subr.mxu0 0.0
  %250 = vmatpush1.msra.mxu0 0.0
  %251 = vmatprep.subr.mxu0 0.0
  %252 = vmatpush1.msra.mxu0 0.0
  %253 = vmatprep.subr.mxu0 0.0
  %254 = vmatpush1.msra.mxu0 0.0
  %255 = vmatprep.subr.mxu0 0.0
  %256 = vmatpush1.msra.mxu0 0.0
  %257 = vmatprep.subr.mxu0 0.0
  %258 = vmatpush1.msra.mxu0 0.0
  %259 = vmatprep.subr.mxu0 0.0
  %260 = vmatpush1.msra.mxu0 0.0
  %261 = vmatprep.subr.mxu0 0.0
  %262 = vmatpush1.msra.mxu0 %v234
  %263 = vmatprep.subr.mxu0 0.0
  %264 = vmatpush1.msra.mxu0 %v233
  %265 = vmatprep.subr.mxu0 0.0
  %266 = vmatpush1.msra.mxu0 %v232
  %267 = vmatprep.subr.mxu0 0.0
  %268 = vmatpush1.msra.mxu0 %v231
  %269 = vmatprep.subr.mxu0 0.0
  %270 = vmatpush2.msra.mxu0 0.0
  %271 = vmatprep.subr.mxu0 0.0
  %272 = vmatpush2.msra.mxu0 0.0
  %273 = vmatprep.subr.mxu0 0.0
  %274 = vmatpush2.msra.mxu0 0.0
  %275 = vmatprep.subr.mxu0 0.0
  %276 = vmatpush2.msra.mxu0 0.0
  %277 = vmatprep.subr.mxu0 0.0
  %278 = vmatpush2.msra.mxu0 0.0
  %279 = vmatprep.subr.mxu0 0.0
  %280 = vmatpush2.msra.mxu0 0.0
  %281 = vmatprep.subr.mxu0 0.0
  %282 = vmatpush2.msra.mxu0 0.0
  %283 = vmatprep.subr.mxu0 0.0
  %284 = vmatpush2.msra.mxu0 0.0
  %285 = vmatprep.subr.mxu0 0.0
  %286 = vmatpush2.msra.mxu0 0.0
  %287 = vmatprep.subr.mxu0 0.0
  %288 = vmatpush2.msra.mxu0 0.0
  %289 = vmatprep.subr.mxu0 0.0
  %290 = vmatpush2.msra.mxu0 0.0
  %291 = vmatprep.subr.mxu0 0.0
  %292 = vmatpush2.msra.mxu0 0.0
  %293 = vmatprep.subr.mxu0 0.0
  %294 = vmatpush2.msra.mxu0 0.0
  %295 = vmatprep.subr.mxu0 0.0
  %296 = vmatpush2.msra.mxu0 0.0
  %297 = vmatprep.subr.mxu0 0.0
  %298 = vmatpush2.msra.mxu0 0.0
  %299 = vmatprep.subr.mxu0 0.0
  %300 = vmatpush2.msra.mxu0 0.0
  %301 = vmatprep.mubr.f32.mxu0 0.0
  %302 = vmatmul.mubr.f32.gmra.mxu0 %v235
  %v303 = vpop.f32.mrf.mxu0
  %v304 = vadd.f32 0.0, %v303
  %v305 = vpop.f32.mrf.mxu0
  %306 = vdwg.mxu0
  %v307 = vadd.f32 %v230, %v304
  %v308 = vxor.u32 %v307, 2147483648
  %v309 = vmul.f32 %v308, 1.442695
  %v310 = vpow.pop %v309
  %v311 = vadd.f32 %v310, 1.0
  %v312 = vrcp.pop %v311
  %v313 = vmul.f32 1.0, %v312
  %v314 = vtanh.pop %v307
  %v315 = vmul.f32 %v313, %v216
  %317 = vrot.lane.b32.xlu0 %v314, 64
  %v318 = vpop.permute.xlu0 %317
  %v320 = vmul.f32 %v313, %v318
  %322 = vrot.lane.b32.xlu0 %v320, 32
  %v323 = vpop.permute.xlu0 %322
  %v325 = vadd.f32 %v315, %v323
  %v326 = vtanh.pop %v325
  %328 = vrot.lane.b32.xlu0 %v326, 64
  %v329 = vpop.permute.xlu0 %328
  %v331 = vmul.f32 %v313, %v329
  %333 = vrot.lane.b32.xlu0 %v331, 32
  %v334 = vpop.permute.xlu0 %333
  %s336 = scalar_lea.vmem %s2, 16
  %337 = vst.msk [vmem:[%s336] sm:$0xff] %vm16, %v334
  %s338 = scalar_lea.vmem %s0, 24
  %v339 = vld [vmem:[%s338] sm:$0xff]
  %v340 = vld [vmem:[%s1] sm:$0xff]
  %v341 = vld [vmem:[%s1 + $0x8] sm:$0xff]
  %v342 = vld [vmem:[%s1 + $0x10] sm:$0xff]
  %v343 = vld [vmem:[%s1 + $0x18] sm:$0xff]
  %v344 = vsel %vm16, %v334, 0
  %346 = vmatprep.subr.mxu0 0.0
  %347 = vmatpush1.msra.mxu0 0.0
  %348 = vmatprep.subr.mxu0 0.0
  %349 = vmatpush1.msra.mxu0 0.0
  %350 = vmatprep.subr.mxu0 0.0
  %351 = vmatpush1.msra.mxu0 0.0
  %352 = vmatprep.subr.mxu0 0.0
  %353 = vmatpush1.msra.mxu0 0.0
  %354 = vmatprep.subr.mxu0 0.0
  %355 = vmatpush1.msra.mxu0 0.0
  %356 = vmatprep.subr.mxu0 0.0
  %357 = vmatpush1.msra.mxu0 0.0
  %358 = vmatprep.subr.mxu0 0.0
  %359 = vmatpush1.msra.mxu0 0.0
  %360 = vmatprep.subr.mxu0 0.0
  %361 = vmatpush1.msra.mxu0 0.0
  %362 = vmatprep.subr.mxu0 0.0
  %363 = vmatpush1.msra.mxu0 0.0
  %364 = vmatprep.subr.mxu0 0.0
  %365 = vmatpush1.msra.mxu0 0.0
  %366 = vmatprep.subr.mxu0 0.0
  %367 = vmatpush1.msra.mxu0 0.0
  %368 = vmatprep.subr.mxu0 0.0
  %369 = vmatpush1.msra.mxu0 0.0
  %370 = vmatprep.subr.mxu0 0.0
  %371 = vmatpush1.msra.mxu0 %v343
  %372 = vmatprep.subr.mxu0 0.0
  %373 = vmatpush1.msra.mxu0 %v342
  %374 = vmatprep.subr.mxu0 0.0
  %375 = vmatpush1.msra.mxu0 %v341
  %376 = vmatprep.subr.mxu0 0.0
  %377 = vmatpush1.msra.mxu0 %v340
  %378 = vmatprep.subr.mxu0 0.0
  %379 = vmatpush2.msra.mxu0 0.0
  %380 = vmatprep.subr.mxu0 0.0
  %381 = vmatpush2.msra.mxu0 0.0
  %382 = vmatprep.subr.mxu0 0.0
  %383 = vmatpush2.msra.mxu0 0.0
  %384 = vmatprep.subr.mxu0 0.0
  %385 = vmatpush2.msra.mxu0 0.0
  %386 = vmatprep.subr.mxu0 0.0
  %387 = vmatpush2.msra.mxu0 0.0
  %388 = vmatprep.subr.mxu0 0.0
  %389 = vmatpush2.msra.mxu0 0.0
  %390 = vmatprep.subr.mxu0 0.0
  %391 = vmatpush2.msra.mxu0 0.0
  %392 = vmatprep.subr.mxu0 0.0
  %393 = vmatpush2.msra.mxu0 0.0
  %394 = vmatprep.subr.mxu0 0.0
  %395 = vmatpush2.msra.mxu0 0.0
  %396 = vmatprep.subr.mxu0 0.0
  %397 = vmatpush2.msra.mxu0 0.0
  %398 = vmatprep.subr.mxu0 0.0
  %399 = vmatpush2.msra.mxu0 0.0
  %400 = vmatprep.subr.mxu0 0.0
  %401 = vmatpush2.msra.mxu0 0.0
  %402 = vmatprep.subr.mxu0 0.0
  %403 = vmatpush2.msra.mxu0 0.0
  %404 = vmatprep.subr.mxu0 0.0
  %405 = vmatpush2.msra.mxu0 0.0
  %406 = vmatprep.subr.mxu0 0.0
  %407 = vmatpush2.msra.mxu0 0.0
  %408 = vmatprep.subr.mxu0 0.0
  %409 = vmatpush2.msra.mxu0 0.0
  %410 = vmatprep.mubr.f32.mxu0 0.0
  %411 = vmatmul.mubr.f32.gmra.mxu0 %v344
  %v412 = vpop.f32.mrf.mxu0
  %v413 = vadd.f32 0.0, %v412
  %v414 = vpop.f32.mrf.mxu0
  %415 = vdwg.mxu0
  %v416 = vadd.f32 %v339, %v413
  %v417 = vxor.u32 %v416, 2147483648
  %v418 = vmul.f32 %v417, 1.442695
  %v419 = vpow.pop %v418
  %v420 = vadd.f32 %v419, 1.0
  %v421 = vrcp.pop %v420
  %v422 = vmul.f32 1.0, %v421
  %v423 = vtanh.pop %v416
  %v424 = vmul.f32 %v422, %v325
  %426 = vrot.lane.b32.xlu0 %v423, 64
  %v427 = vpop.permute.xlu0 %426
  %v429 = vmul.f32 %v422, %v427
  %431 = vrot.lane.b32.xlu0 %v429, 32
  %v432 = vpop.permute.xlu0 %431
  %v434 = vadd.f32 %v424, %v432
  %v435 = vtanh.pop %v434
  %437 = vrot.lane.b32.xlu0 %v435, 64
  %v438 = vpop.permute.xlu0 %437
  %v440 = vmul.f32 %v422, %v438
  %442 = vrot.lane.b32.xlu0 %v440, 32
  %v443 = vpop.permute.xlu0 %442
  %s445 = scalar_lea.vmem %s2, 24
  %446 = vst.msk [vmem:[%s445] sm:$0xff] %vm16, %v443
  %s447 = scalar_lea.vmem %s0, 32
  %v448 = vld [vmem:[%s447] sm:$0xff]
  %v449 = vld [vmem:[%s1] sm:$0xff]
  %v450 = vld [vmem:[%s1 + $0x8] sm:$0xff]
  %v451 = vld [vmem:[%s1 + $0x10] sm:$0xff]
  %v452 = vld [vmem:[%s1 + $0x18] sm:$0xff]
  %v453 = vsel %vm16, %v443, 0
  %455 = vmatprep.subr.mxu0 0.0
  %456 = vmatpush1.msra.mxu0 0.0
  %457 = vmatprep.subr.mxu0 0.0
  %458 = vmatpush1.msra.mxu0 0.0
  %459 = vmatprep.subr.mxu0 0.0
  %460 = vmatpush1.msra.mxu0 0.0
  %461 = vmatprep.subr.mxu0 0.0
  %462 = vmatpush1.msra.mxu0 0.0
  %463 = vmatprep.subr.mxu0 0.0
  %464 = vmatpush1.msra.mxu0 0.0
  %465 = vmatprep.subr.mxu0 0.0
  %466 = vmatpush1.msra.mxu0 0.0
  %467 = vmatprep.subr.mxu0 0.0
  %468 = vmatpush1.msra.mxu0 0.0
  %469 = vmatprep.subr.mxu0 0.0
  %470 = vmatpush1.msra.mxu0 0.0
  %471 = vmatprep.subr.mxu0 0.0
  %472 = vmatpush1.msra.mxu0 0.0
  %473 = vmatprep.subr.mxu0 0.0
  %474 = vmatpush1.msra.mxu0 0.0
  %475 = vmatprep.subr.mxu0 0.0
  %476 = vmatpush1.msra.mxu0 0.0
  %477 = vmatprep.subr.mxu0 0.0
  %478 = vmatpush1.msra.mxu0 0.0
  %479 = vmatprep.subr.mxu0 0.0
  %480 = vmatpush1.msra.mxu0 %v452
  %481 = vmatprep.subr.mxu0 0.0
  %482 = vmatpush1.msra.mxu0 %v451
  %483 = vmatprep.subr.mxu0 0.0
  %484 = vmatpush1.msra.mxu0 %v450
  %485 = vmatprep.subr.mxu0 0.0
  %486 = vmatpush1.msra.mxu0 %v449
  %487 = vmatprep.subr.mxu0 0.0
  %488 = vmatpush2.msra.mxu0 0.0
  %489 = vmatprep.subr.mxu0 0.0
  %490 = vmatpush2.msra.mxu0 0.0
  %491 = vmatprep.subr.mxu0 0.0
  %492 = vmatpush2.msra.mxu0 0.0
  %493 = vmatprep.subr.mxu0 0.0
  %494 = vmatpush2.msra.mxu0 0.0
  %495 = vmatprep.subr.mxu0 0.0
  %496 = vmatpush2.msra.mxu0 0.0
  %497 = vmatprep.subr.mxu0 0.0
  %498 = vmatpush2.msra.mxu0 0.0
  %499 = vmatprep.subr.mxu0 0.0
  %500 = vmatpush2.msra.mxu0 0.0
  %501 = vmatprep.subr.mxu0 0.0
  %502 = vmatpush2.msra.mxu0 0.0
  %503 = vmatprep.subr.mxu0 0.0
  %504 = vmatpush2.msra.mxu0 0.0
  %505 = vmatprep.subr.mxu0 0.0
  %506 = vmatpush2.msra.mxu0 0.0
  %507 = vmatprep.subr.mxu0 0.0
  %508 = vmatpush2.msra.mxu0 0.0
  %509 = vmatprep.subr.mxu0 0.0
  %510 = vmatpush2.msra.mxu0 0.0
  %511 = vmatprep.subr.mxu0 0.0
  %512 = vmatpush2.msra.mxu0 0.0
  %513 = vmatprep.subr.mxu0 0.0
  %514 = vmatpush2.msra.mxu0 0.0
  %515 = vmatprep.subr.mxu0 0.0
  %516 = vmatpush2.msra.mxu0 0.0
  %517 = vmatprep.subr.mxu0 0.0
  %518 = vmatpush2.msra.mxu0 0.0
  %519 = vmatprep.mubr.f32.mxu0 0.0
  %520 = vmatmul.mubr.f32.gmra.mxu0 %v453
  %v521 = vpop.f32.mrf.mxu0
  %v522 = vadd.f32 0.0, %v521
  %v523 = vpop.f32.mrf.mxu0
  %524 = vdwg.mxu0
  %v525 = vadd.f32 %v448, %v522
  %v526 = vxor.u32 %v525, 2147483648
  %v527 = vmul.f32 %v526, 1.442695
  %v528 = vpow.pop %v527
  %v529 = vadd.f32 %v528, 1.0
  %v530 = vrcp.pop %v529
  %v531 = vmul.f32 1.0, %v530
  %v532 = vtanh.pop %v525
  %v533 = vmul.f32 %v531, %v434
  %535 = vrot.lane.b32.xlu0 %v532, 64
  %v536 = vpop.permute.xlu0 %535
  %v538 = vmul.f32 %v531, %v536
  %540 = vrot.lane.b32.xlu0 %v538, 32
  %v541 = vpop.permute.xlu0 %540
  %v543 = vadd.f32 %v533, %v541
  %v544 = vtanh.pop %v543
  %546 = vrot.lane.b32.xlu0 %v544, 64
  %v547 = vpop.permute.xlu0 %546
  %v549 = vmul.f32 %v531, %v547
  %551 = vrot.lane.b32.xlu0 %v549, 32
  %v552 = vpop.permute.xlu0 %551
  %s554 = scalar_lea.vmem %s2, 32
  %555 = vst.msk [vmem:[%s554] sm:$0xff] %vm16, %v552
  %s556 = scalar_lea.vmem %s0, 40
  %v557 = vld [vmem:[%s556] sm:$0xff]
  %v558 = vld [vmem:[%s1] sm:$0xff]
  %v559 = vld [vmem:[%s1 + $0x8] sm:$0xff]
  %v560 = vld [vmem:[%s1 + $0x10] sm:$0xff]
  %v561 = vld [vmem:[%s1 + $0x18] sm:$0xff]
  %v562 = vsel %vm16, %v552, 0
  %564 = vmatprep.subr.mxu0 0.0
  %565 = vmatpush1.msra.mxu0 0.0
  %566 = vmatprep.subr.mxu0 0.0
  %567 = vmatpush1.msra.mxu0 0.0
  %568 = vmatprep.subr.mxu0 0.0
  %569 = vmatpush1.msra.mxu0 0.0
  %570 = vmatprep.subr.mxu0 0.0
  %571 = vmatpush1.msra.mxu0 0.0
  %572 = vmatprep.subr.mxu0 0.0
  %573 = vmatpush1.msra.mxu0 0.0
  %574 = vmatprep.subr.mxu0 0.0
  %575 = vmatpush1.msra.mxu0 0.0
  %576 = vmatprep.subr.mxu0 0.0
  %577 = vmatpush1.msra.mxu0 0.0
  %578 = vmatprep.subr.mxu0 0.0
  %579 = vmatpush1.msra.mxu0 0.0
  %580 = vmatprep.subr.mxu0 0.0
  %581 = vmatpush1.msra.mxu0 0.0
  %582 = vmatprep.subr.mxu0 0.0
  %583 = vmatpush1.msra.mxu0 0.0
  %584 = vmatprep.subr.mxu0 0.0
  %585 = vmatpush1.msra.mxu0 0.0
  %586 = vmatprep.subr.mxu0 0.0
  %587 = vmatpush1.msra.mxu0 0.0
  %588 = vmatprep.subr.mxu0 0.0
  %589 = vmatpush1.msra.mxu0 %v561
  %590 = vmatprep.subr.mxu0 0.0
  %591 = vmatpush1.msra.mxu0 %v560
  %592 = vmatprep.subr.mxu0 0.0
  %593 = vmatpush1.msra.mxu0 %v559
  %594 = vmatprep.subr.mxu0 0.0
  %595 = vmatpush1.msra.mxu0 %v558
  %596 = vmatprep.subr.mxu0 0.0
  %597 = vmatpush2.msra.mxu0 0.0
  %598 = vmatprep.subr.mxu0 0.0
  %599 = vmatpush2.msra.mxu0 0.0
  %600 = vmatprep.subr.mxu0 0.0
  %601 = vmatpush2.msra.mxu0 0.0
  %602 = vmatprep.subr.mxu0 0.0
  %603 = vmatpush2.msra.mxu0 0.0
  %604 = vmatprep.subr.mxu0 0.0
  %605 = vmatpush2.msra.mxu0 0.0
  %606 = vmatprep.subr.mxu0 0.0
  %607 = vmatpush2.msra.mxu0 0.0
  %608 = vmatprep.subr.mxu0 0.0
  %609 = vmatpush2.msra.mxu0 0.0
  %610 = vmatprep.subr.mxu0 0.0
  %611 = vmatpush2.msra.mxu0 0.0
  %612 = vmatprep.subr.mxu0 0.0
  %613 = vmatpush2.msra.mxu0 0.0
  %614 = vmatprep.subr.mxu0 0.0
  %615 = vmatpush2.msra.mxu0 0.0
  %616 = vmatprep.subr.mxu0 0.0
  %617 = vmatpush2.msra.mxu0 0.0
  %618 = vmatprep.subr.mxu0 0.0
  %619 = vmatpush2.msra.mxu0 0.0
  %620 = vmatprep.subr.mxu0 0.0
  %621 = vmatpush2.msra.mxu0 0.0
  %622 = vmatprep.subr.mxu0 0.0
  %623 = vmatpush2.msra.mxu0 0.0
  %624 = vmatprep.subr.mxu0 0.0
  %625 = vmatpush2.msra.mxu0 0.0
  %626 = vmatprep.subr.mxu0 0.0
  %627 = vmatpush2.msra.mxu0 0.0
  %628 = vmatprep.mubr.f32.mxu0 0.0
  %629 = vmatmul.mubr.f32.gmra.mxu0 %v562
  %v630 = vpop.f32.mrf.mxu0
  %v631 = vadd.f32 0.0, %v630
  %v632 = vpop.f32.mrf.mxu0
  %633 = vdwg.mxu0
  %v634 = vadd.f32 %v557, %v631
  %v635 = vxor.u32 %v634, 2147483648
  %v636 = vmul.f32 %v635, 1.442695
  %v637 = vpow.pop %v636
  %v638 = vadd.f32 %v637, 1.0
  %v639 = vrcp.pop %v638
  %v640 = vmul.f32 1.0, %v639
  %v641 = vtanh.pop %v634
  %v642 = vmul.f32 %v640, %v543
  %644 = vrot.lane.b32.xlu0 %v641, 64
  %v645 = vpop.permute.xlu0 %644
  %v647 = vmul.f32 %v640, %v645
  %649 = vrot.lane.b32.xlu0 %v647, 32
  %v650 = vpop.permute.xlu0 %649
  %v652 = vadd.f32 %v642, %v650
  %v653 = vtanh.pop %v652
  %655 = vrot.lane.b32.xlu0 %v653, 64
  %v656 = vpop.permute.xlu0 %655
  %v658 = vmul.f32 %v640, %v656
  %660 = vrot.lane.b32.xlu0 %v658, 32
  %v661 = vpop.permute.xlu0 %660
  %s663 = scalar_lea.vmem %s2, 40
  %664 = vst.msk [vmem:[%s663] sm:$0xff] %vm16, %v661
  %s665 = scalar_lea.vmem %s0, 48
  %v666 = vld [vmem:[%s665] sm:$0xff]
  %v667 = vld [vmem:[%s1] sm:$0xff]
  %v668 = vld [vmem:[%s1 + $0x8] sm:$0xff]
  %v669 = vld [vmem:[%s1 + $0x10] sm:$0xff]
  %v670 = vld [vmem:[%s1 + $0x18] sm:$0xff]
  %v671 = vsel %vm16, %v661, 0
  %673 = vmatprep.subr.mxu0 0.0
  %674 = vmatpush1.msra.mxu0 0.0
  %675 = vmatprep.subr.mxu0 0.0
  %676 = vmatpush1.msra.mxu0 0.0
  %677 = vmatprep.subr.mxu0 0.0
  %678 = vmatpush1.msra.mxu0 0.0
  %679 = vmatprep.subr.mxu0 0.0
  %680 = vmatpush1.msra.mxu0 0.0
  %681 = vmatprep.subr.mxu0 0.0
  %682 = vmatpush1.msra.mxu0 0.0
  %683 = vmatprep.subr.mxu0 0.0
  %684 = vmatpush1.msra.mxu0 0.0
  %685 = vmatprep.subr.mxu0 0.0
  %686 = vmatpush1.msra.mxu0 0.0
  %687 = vmatprep.subr.mxu0 0.0
  %688 = vmatpush1.msra.mxu0 0.0
  %689 = vmatprep.subr.mxu0 0.0
  %690 = vmatpush1.msra.mxu0 0.0
  %691 = vmatprep.subr.mxu0 0.0
  %692 = vmatpush1.msra.mxu0 0.0
  %693 = vmatprep.subr.mxu0 0.0
  %694 = vmatpush1.msra.mxu0 0.0
  %695 = vmatprep.subr.mxu0 0.0
  %696 = vmatpush1.msra.mxu0 0.0
  %697 = vmatprep.subr.mxu0 0.0
  %698 = vmatpush1.msra.mxu0 %v670
  %699 = vmatprep.subr.mxu0 0.0
  %700 = vmatpush1.msra.mxu0 %v669
  %701 = vmatprep.subr.mxu0 0.0
  %702 = vmatpush1.msra.mxu0 %v668
  %703 = vmatprep.subr.mxu0 0.0
  %704 = vmatpush1.msra.mxu0 %v667
  %705 = vmatprep.subr.mxu0 0.0
  %706 = vmatpush2.msra.mxu0 0.0
  %707 = vmatprep.subr.mxu0 0.0
  %708 = vmatpush2.msra.mxu0 0.0
  %709 = vmatprep.subr.mxu0 0.0
  %710 = vmatpush2.msra.mxu0 0.0
  %711 = vmatprep.subr.mxu0 0.0
  %712 = vmatpush2.msra.mxu0 0.0
  %713 = vmatprep.subr.mxu0 0.0
  %714 = vmatpush2.msra.mxu0 0.0
  %715 = vmatprep.subr.mxu0 0.0
  %716 = vmatpush2.msra.mxu0 0.0
  %717 = vmatprep.subr.mxu0 0.0
  %718 = vmatpush2.msra.mxu0 0.0
  %719 = vmatprep.subr.mxu0 0.0
  %720 = vmatpush2.msra.mxu0 0.0
  %721 = vmatprep.subr.mxu0 0.0
  %722 = vmatpush2.msra.mxu0 0.0
  %723 = vmatprep.subr.mxu0 0.0
  %724 = vmatpush2.msra.mxu0 0.0
  %725 = vmatprep.subr.mxu0 0.0
  %726 = vmatpush2.msra.mxu0 0.0
  %727 = vmatprep.subr.mxu0 0.0
  %728 = vmatpush2.msra.mxu0 0.0
  %729 = vmatprep.subr.mxu0 0.0
  %730 = vmatpush2.msra.mxu0 0.0
  %731 = vmatprep.subr.mxu0 0.0
  %732 = vmatpush2.msra.mxu0 0.0
  %733 = vmatprep.subr.mxu0 0.0
  %734 = vmatpush2.msra.mxu0 0.0
  %735 = vmatprep.subr.mxu0 0.0
  %736 = vmatpush2.msra.mxu0 0.0
  %737 = vmatprep.mubr.f32.mxu0 0.0
  %738 = vmatmul.mubr.f32.gmra.mxu0 %v671
  %v739 = vpop.f32.mrf.mxu0
  %v740 = vadd.f32 0.0, %v739
  %v741 = vpop.f32.mrf.mxu0
  %742 = vdwg.mxu0
  %v743 = vadd.f32 %v666, %v740
  %v744 = vxor.u32 %v743, 2147483648
  %v745 = vmul.f32 %v744, 1.442695
  %v746 = vpow.pop %v745
  %v747 = vadd.f32 %v746, 1.0
  %v748 = vrcp.pop %v747
  %v749 = vmul.f32 1.0, %v748
  %v750 = vtanh.pop %v743
  %v751 = vmul.f32 %v749, %v652
  %753 = vrot.lane.b32.xlu0 %v750, 64
  %v754 = vpop.permute.xlu0 %753
  %v756 = vmul.f32 %v749, %v754
  %758 = vrot.lane.b32.xlu0 %v756, 32
  %v759 = vpop.permute.xlu0 %758
  %v761 = vadd.f32 %v751, %v759
  %v762 = vtanh.pop %v761
  %764 = vrot.lane.b32.xlu0 %v762, 64
  %v765 = vpop.permute.xlu0 %764
  %v767 = vmul.f32 %v749, %v765
  %769 = vrot.lane.b32.xlu0 %v767, 32
  %v770 = vpop.permute.xlu0 %769
  %s772 = scalar_lea.vmem %s2, 48
  %773 = vst.msk [vmem:[%s772] sm:$0xff] %vm16, %v770
  %s774 = scalar_lea.vmem %s0, 56
  %v775 = vld [vmem:[%s774] sm:$0xff]
  %v776 = vld [vmem:[%s1] sm:$0xff]
  %v777 = vld [vmem:[%s1 + $0x8] sm:$0xff]
  %v778 = vld [vmem:[%s1 + $0x10] sm:$0xff]
  %v779 = vld [vmem:[%s1 + $0x18] sm:$0xff]
  %v780 = vsel %vm16, %v770, 0
  %782 = vmatprep.subr.mxu0 0.0
  %783 = vmatpush1.msra.mxu0 0.0
  %784 = vmatprep.subr.mxu0 0.0
  %785 = vmatpush1.msra.mxu0 0.0
  %786 = vmatprep.subr.mxu0 0.0
  %787 = vmatpush1.msra.mxu0 0.0
  %788 = vmatprep.subr.mxu0 0.0
  %789 = vmatpush1.msra.mxu0 0.0
  %790 = vmatprep.subr.mxu0 0.0
  %791 = vmatpush1.msra.mxu0 0.0
  %792 = vmatprep.subr.mxu0 0.0
  %793 = vmatpush1.msra.mxu0 0.0
  %794 = vmatprep.subr.mxu0 0.0
  %795 = vmatpush1.msra.mxu0 0.0
  %796 = vmatprep.subr.mxu0 0.0
  %797 = vmatpush1.msra.mxu0 0.0
  %798 = vmatprep.subr.mxu0 0.0
  %799 = vmatpush1.msra.mxu0 0.0
  %800 = vmatprep.subr.mxu0 0.0
  %801 = vmatpush1.msra.mxu0 0.0
  %802 = vmatprep.subr.mxu0 0.0
  %803 = vmatpush1.msra.mxu0 0.0
  %804 = vmatprep.subr.mxu0 0.0
  %805 = vmatpush1.msra.mxu0 0.0
  %806 = vmatprep.subr.mxu0 0.0
  %807 = vmatpush1.msra.mxu0 %v779
  %808 = vmatprep.subr.mxu0 0.0
  %809 = vmatpush1.msra.mxu0 %v778
  %810 = vmatprep.subr.mxu0 0.0
  %811 = vmatpush1.msra.mxu0 %v777
  %812 = vmatprep.subr.mxu0 0.0
  %813 = vmatpush1.msra.mxu0 %v776
  %814 = vmatprep.subr.mxu0 0.0
  %815 = vmatpush2.msra.mxu0 0.0
  %816 = vmatprep.subr.mxu0 0.0
  %817 = vmatpush2.msra.mxu0 0.0
  %818 = vmatprep.subr.mxu0 0.0
  %819 = vmatpush2.msra.mxu0 0.0
  %820 = vmatprep.subr.mxu0 0.0
  %821 = vmatpush2.msra.mxu0 0.0
  %822 = vmatprep.subr.mxu0 0.0
  %823 = vmatpush2.msra.mxu0 0.0
  %824 = vmatprep.subr.mxu0 0.0
  %825 = vmatpush2.msra.mxu0 0.0
  %826 = vmatprep.subr.mxu0 0.0
  %827 = vmatpush2.msra.mxu0 0.0
  %828 = vmatprep.subr.mxu0 0.0
  %829 = vmatpush2.msra.mxu0 0.0
  %830 = vmatprep.subr.mxu0 0.0
  %831 = vmatpush2.msra.mxu0 0.0
  %832 = vmatprep.subr.mxu0 0.0
  %833 = vmatpush2.msra.mxu0 0.0
  %834 = vmatprep.subr.mxu0 0.0
  %835 = vmatpush2.msra.mxu0 0.0
  %836 = vmatprep.subr.mxu0 0.0
  %837 = vmatpush2.msra.mxu0 0.0
  %838 = vmatprep.subr.mxu0 0.0
  %839 = vmatpush2.msra.mxu0 0.0
  %840 = vmatprep.subr.mxu0 0.0
  %841 = vmatpush2.msra.mxu0 0.0
  %842 = vmatprep.subr.mxu0 0.0
  %843 = vmatpush2.msra.mxu0 0.0
  %844 = vmatprep.subr.mxu0 0.0
  %845 = vmatpush2.msra.mxu0 0.0
  %846 = vmatprep.mubr.f32.mxu0 0.0
  %847 = vmatmul.mubr.f32.gmra.mxu0 %v780
  %v848 = vpop.f32.mrf.mxu0
  %v849 = vadd.f32 0.0, %v848
  %v850 = vpop.f32.mrf.mxu0
  %851 = vdwg.mxu0
  %v852 = vadd.f32 %v775, %v849
  %v853 = vxor.u32 %v852, 2147483648
  %v854 = vmul.f32 %v853, 1.442695
  %v855 = vpow.pop %v854
  %v856 = vadd.f32 %v855, 1.0
  %v857 = vrcp.pop %v856
  %v858 = vmul.f32 1.0, %v857
  %v859 = vtanh.pop %v852
  %v860 = vmul.f32 %v858, %v761
  %862 = vrot.lane.b32.xlu0 %v859, 64
  %v863 = vpop.permute.xlu0 %862
  %v865 = vmul.f32 %v858, %v863
  %867 = vrot.lane.b32.xlu0 %v865, 32
  %v868 = vpop.permute.xlu0 %867
  %v870 = vadd.f32 %v860, %v868
  %v871 = vtanh.pop %v870
  %873 = vrot.lane.b32.xlu0 %v871, 64
  %v874 = vpop.permute.xlu0 %873
  %v876 = vmul.f32 %v858, %v874
  %878 = vrot.lane.b32.xlu0 %v876, 32
  %v879 = vpop.permute.xlu0 %878
  %s881 = scalar_lea.vmem %s2, 56
  %882 = vst.msk [vmem:[%s881] sm:$0xff] %vm16, %v879
  // Predicated region
  $region10: #{decoder_rnn_forward.1} parent=0 // pred_check
    _
  $region11: #{decoder_rnn_forward.1} parent=0 // pred_check_branch
    %884 = sbr.rel (0) target = $region13
  $region12: #{decoder_rnn_forward.1} parent=0 // pred_region
    _
  $region13: #{decoder_rnn_forward.1} parent=0 // pred_fallthru
    _
  // Predicated region
  $region14: #{decoder_rnn_forward.1} parent=0 // pred_check
    _
  $region15: #{decoder_rnn_forward.1} parent=0 // pred_check_branch
    %886 = sbr.rel (0) target = $region17
  $region16: #{decoder_rnn_forward.1} parent=0 // pred_region
    _
  $region17: #{decoder_rnn_forward.1} parent=0 // pred_fallthru
    _

</llo_original>
